<compile_context>
chip_gen: v7x
topology: tpu7x:2x2x1
jax: 0.10.0
libtpu: 0.0.40
codegen_flags: <defaults>
</compile_context>

<pallas_src>
import functools
import math

import jax
import jax.numpy as jnp
from jax.experimental import pallas as pl
from jax.experimental.pallas import tpu as pltpu


def _self_attention_kernel(x_ref, mflag_ref, wqkv_ref, bqkv_ref, o_ref, *,
                           batch, seq, head_dim):
    # x_ref:     (B*S, E) f32      -- batch folded into the M dimension
    # mflag_ref: (B, S)   i32      -- 1 where original mask == 2, else 0
    # wqkv_ref:  (E, 3H)  f32      -- [Wq | Wk | Wv] fused along N
    # bqkv_ref:  (1, 3H)  f32
    # o_ref:     (B*S, H) f32
    x = x_ref[...]

    # Single fused QKV projection: one MXU pass over all batch*seq rows.
    qkv = jnp.dot(x, wqkv_ref[...],
                  preferred_element_type=jnp.float32) + bqkv_ref[...]

    inv_scale = jnp.float32(1.0 / math.sqrt(head_dim))
    mflag = mflag_ref[...]                                      # (B, S)

    # Per-batch attention; B is tiny & static -> unrolled, everything stays 2-D.
    for b in range(batch):
        r0 = b * seq
        qb = qkv[r0:r0 + seq, 0 * head_dim:1 * head_dim]        # (S, H)
        kb = qkv[r0:r0 + seq, 1 * head_dim:2 * head_dim]        # (S, H)
        vb = qkv[r0:r0 + seq, 2 * head_dim:3 * head_dim]        # (S, H)

        # Q @ K^T without materializing K^T: contract last dims of both.
        scores = jax.lax.dot_general(
            qb, kb,
            dimension_numbers=(((1,), (1,)), ((), ())),
            preferred_element_type=jnp.float32) * inv_scale      # (S, S)

        # masked_fill(mask == 2, 1e-9): masks key columns, broadcast over rows.
        mb = mflag[b:b + 1, :]                                   # (1, S)
        scores = jnp.where(mb != 0, jnp.float32(1e-09), scores)

        # Softmax over keys, f32 on VPU/EUP; reciprocal goes to the EUP slot.
        scores = scores - jnp.max(scores, axis=-1, keepdims=True)
        e = jnp.exp(scores)
        p = e * pl.reciprocal(jnp.sum(e, axis=-1, keepdims=True), approx=True)

        out_b = jnp.dot(p, vb, preferred_element_type=jnp.float32)   # (S, H)
        o_ref[r0:r0 + seq, :] = out_b.astype(o_ref.dtype)


def self_attention(x, mask, wq, bq, wk, bk, wv, bv):
    B, S, E = x.shape
    H = wq.shape[1]

    # Fuse the three projections: one (E, 3H) weight, one (1, 3H) bias.
    wqkv = jnp.concatenate([wq, wk, wv], axis=1)
    bqkv = jnp.concatenate([bq, bk, bv]).reshape(1, 3 * H)

    # Fold batch into the matmul M dimension.
    x2d = x.reshape(B * S, E)

    # Precompute the mask predicate once (hoisted out of the kernel body).
    mflag = (mask == 2).astype(jnp.int32)

    kernel = functools.partial(_self_attention_kernel,
                               batch=B, seq=S, head_dim=H)

    out2d = pl.pallas_call(
        kernel,
        out_shape=jax.ShapeDtypeStruct((B * S, H), jnp.float32),
        # Single invocation (no grid): each operand is one whole-array VMEM
        # block, so weights/bias/mask are DMA'd into VMEM exactly once.
        in_specs=[
            pl.BlockSpec(memory_space=pltpu.MemorySpace.VMEM),   # x2d   (B*S, E)
            pl.BlockSpec(memory_space=pltpu.MemorySpace.VMEM),   # mflag (B, S)
            pl.BlockSpec(memory_space=pltpu.MemorySpace.VMEM),   # Wqkv  (E, 3H)
            pl.BlockSpec(memory_space=pltpu.MemorySpace.VMEM),   # bqkv  (1, 3H)
        ],
        out_specs=pl.BlockSpec(memory_space=pltpu.MemorySpace.VMEM),
    )(x2d, mflag, wqkv, bqkv)

    return out2d.reshape(B, S, H)


def self_attention_ref(x, mask, wq, bq, wk, bk, wv, bv):
    """Pure-JAX reference matching the PyTorch forward exactly."""
    q = x @ wq + bq
    k = x @ wk + bk
    v = x @ wv + bv
    aw = jnp.einsum("bqh,bkh->bqk", q, k) / math.sqrt(wq.shape[1])
    m = mask.reshape(aw.shape[0], 1, aw.shape[2])
    aw = jnp.where(m == 2, 1e-09, aw)
    p = jax.nn.softmax(aw, axis=-1)
    return jnp.einsum("bqk,bkh->bqh", p, v)


if __name__ == "__main__":
    B, S, E, H = 2, 8, 32, 16

    key = jax.random.PRNGKey(0)
    kx, kq, kk, kv, kbq, kbk, kbv, km = jax.random.split(key, 8)

    x = jax.random.normal(kx, (B, S, E), dtype=jnp.float32)
    # mask values in {0, 1, 2}; value 2 marks positions to be "whited-out"
    mask = jax.random.randint(km, (B, S), 0, 3, dtype=jnp.int32)

    # nn.Linear-like uniform init; weights stored as [E, H] (transpose of
    # PyTorch's [H, E]) so projection is x @ W + b.
    bound = 1.0 / math.sqrt(E)
    wq = jax.random.uniform(kq, (E, H), jnp.float32, -bound, bound)
    wk = jax.random.uniform(kk, (E, H), jnp.float32, -bound, bound)
    wv = jax.random.uniform(kv, (E, H), jnp.float32, -bound, bound)
    bq = jax.random.uniform(kbq, (H,), jnp.float32, -bound, bound)
    bk = jax.random.uniform(kbk, (H,), jnp.float32, -bound, bound)
    bv = jax.random.uniform(kbv, (H,), jnp.float32, -bound, bound)

    out = self_attention(x, mask, wq, bq, wk, bk, wv, bv)
    out = jax.block_until_ready(out)

    ref = self_attention_ref(x, mask, wq, bq, wk, bk, wv, bv)
    assert out.shape == (B, S, H)
    # Tolerance loosened because the softmax denominator uses the EUP's
    # approximate reciprocal (pl.reciprocal(..., approx=True), ~1e-3 rel err).
    assert jnp.allclose(out, ref, atol=5e-3, rtol=5e-3), "mismatch vs reference"

    print("KERNEL_OK")
</pallas_src>

<mosaic_0001>
module attributes {stable_mosaic.version = 11 : i64} {
  func.func @_self_attention_kernel(%arg0: memref<16x32xf32, #tpu.memory_space<vmem>>, %arg1: memref<2x8xi32, #tpu.memory_space<vmem>>, %arg2: memref<32x48xf32, #tpu.memory_space<vmem>>, %arg3: memref<1x48xf32, #tpu.memory_space<vmem>>, %arg4: memref<16x16xf32, #tpu.memory_space<vmem>>) attributes {dimension_semantics = [], scalar_prefetch = 0 : i64, scratch_operands = 0 : i64, tpu.core_type = #tpu.core_type<tc>} {
    %c0 = arith.constant 0 : index
    %c0_0 = arith.constant 0 : index
    %0 = vector.load %arg0[%c0, %c0_0] : memref<16x32xf32, #tpu.memory_space<vmem>>, vector<16x32xf32>
    %c0_1 = arith.constant 0 : index
    %c0_2 = arith.constant 0 : index
    %1 = vector.load %arg2[%c0_1, %c0_2] : memref<32x48xf32, #tpu.memory_space<vmem>>, vector<32x48xf32>
    %cst = arith.constant dense<0.000000e+00> : vector<16x48xf32>
    %2 = tpu.matmul %0, %1, %cst {dimension_numbers = #tpu.dot_dimension_numbers<[1], [0], [0], [1], [0, 0, 1, 1], [], []>} : vector<16x32xf32>, vector<32x48xf32>, vector<16x48xf32> -> vector<16x48xf32>
    %c0_3 = arith.constant 0 : index
    %c0_4 = arith.constant 0 : index
    %3 = vector.load %arg3[%c0_3, %c0_4] : memref<1x48xf32, #tpu.memory_space<vmem>>, vector<1x48xf32>
    %4 = vector.broadcast %3 : vector<1x48xf32> to vector<16x48xf32>
    %5 = arith.addf %2, %4 : vector<16x48xf32>
    %c0_5 = arith.constant 0 : index
    %c0_6 = arith.constant 0 : index
    %6 = vector.load %arg1[%c0_5, %c0_6] : memref<2x8xi32, #tpu.memory_space<vmem>>, vector<2x8xi32>
    %7 = vector.extract_strided_slice %5 {offsets = [0, 0], sizes = [8, 16], strides = [1, 1]} : vector<16x48xf32> to vector<8x16xf32>
    %8 = vector.extract_strided_slice %5 {offsets = [0, 16], sizes = [8, 16], strides = [1, 1]} : vector<16x48xf32> to vector<8x16xf32>
    %9 = vector.extract_strided_slice %5 {offsets = [0, 32], sizes = [8, 16], strides = [1, 1]} : vector<16x48xf32> to vector<8x16xf32>
    %cst_7 = arith.constant dense<0.000000e+00> : vector<8x8xf32>
    %10 = tpu.matmul %7, %8, %cst_7 {dimension_numbers = #tpu.dot_dimension_numbers<[1], [1], [0], [0], [0, 0, 1, 0], [], []>} : vector<8x16xf32>, vector<8x16xf32>, vector<8x8xf32> -> vector<8x8xf32>
    %cst_8 = arith.constant 2.500000e-01 : f32
    %11 = vector.broadcast %cst_8 : f32 to vector<8x8xf32>
    %12 = arith.mulf %10, %11 : vector<8x8xf32>
    %13 = vector.extract_strided_slice %6 {offsets = [0, 0], sizes = [1, 8], strides = [1, 1]} : vector<2x8xi32> to vector<1x8xi32>
    %c0_i32 = arith.constant 0 : i32
    %14 = vector.broadcast %c0_i32 : i32 to vector<1x8xi32>
    %15 = arith.cmpi ne, %13, %14 : vector<1x8xi32>
    %cst_9 = arith.constant 9.99999971E-10 : f32
    %16 = vector.shape_cast %15 : vector<1x8xi1> to vector<1x8xi1>
    %17 = vector.broadcast %16 : vector<1x8xi1> to vector<8x8xi1>
    %18 = vector.broadcast %cst_9 : f32 to vector<8x8xf32>
    %19 = arith.select %17, %18, %12 : vector<8x8xi1>, vector<8x8xf32>
    %cst_10 = arith.constant dense<0xFF800000> : vector<8xf32>
    %20 = vector.multi_reduction <maximumf>, %19, %cst_10 [1] : vector<8x8xf32> to vector<8xf32>
    %21 = vector.shape_cast %20 : vector<8xf32> to vector<8x1xf32>
    %22 = vector.broadcast %21 : vector<8x1xf32> to vector<8x8xf32>
    %23 = arith.subf %19, %22 : vector<8x8xf32>
    %24 = math.exp %23 : vector<8x8xf32>
    %cst_11 = arith.constant dense<0.000000e+00> : vector<8xf32>
    %25 = vector.multi_reduction <add>, %24, %cst_11 [1] : vector<8x8xf32> to vector<8xf32>
    %26 = vector.shape_cast %25 : vector<8xf32> to vector<8x1xf32>
    %27 = tpu.reciprocal %26 {approx = true} : vector<8x1xf32> -> vector<8x1xf32>
    %28 = vector.broadcast %27 : vector<8x1xf32> to vector<8x8xf32>
    %29 = arith.mulf %24, %28 : vector<8x8xf32>
    %cst_12 = arith.constant dense<0.000000e+00> : vector<8x16xf32>
    %30 = tpu.matmul %29, %9, %cst_12 {dimension_numbers = #tpu.dot_dimension_numbers<[1], [0], [0], [1], [0, 0, 1, 1], [], []>} : vector<8x8xf32>, vector<8x16xf32>, vector<8x16xf32> -> vector<8x16xf32>
    %c0_13 = arith.constant 0 : index
    %c0_14 = arith.constant 0 : index
    %31 = vector.load %arg4[%c0_13, %c0_14] : memref<16x16xf32, #tpu.memory_space<vmem>>, vector<8x16xf32>
    tpu.vector_store %arg4[%c0_13, %c0_14], %30 {strides = array<i32>} : memref<16x16xf32, #tpu.memory_space<vmem>>, vector<8x16xf32>,
    %32 = vector.extract_strided_slice %5 {offsets = [8, 0], sizes = [8, 16], strides = [1, 1]} : vector<16x48xf32> to vector<8x16xf32>
    %33 = vector.extract_strided_slice %5 {offsets = [8, 16], sizes = [8, 16], strides = [1, 1]} : vector<16x48xf32> to vector<8x16xf32>
    %34 = vector.extract_strided_slice %5 {offsets = [8, 32], sizes = [8, 16], strides = [1, 1]} : vector<16x48xf32> to vector<8x16xf32>
    %cst_15 = arith.constant dense<0.000000e+00> : vector<8x8xf32>
    %35 = tpu.matmul %32, %33, %cst_15 {dimension_numbers = #tpu.dot_dimension_numbers<[1], [1], [0], [0], [0, 0, 1, 0], [], []>} : vector<8x16xf32>, vector<8x16xf32>, vector<8x8xf32> -> vector<8x8xf32>
    %cst_16 = arith.constant 2.500000e-01 : f32
    %36 = vector.broadcast %cst_16 : f32 to vector<8x8xf32>
    %37 = arith.mulf %35, %36 : vector<8x8xf32>
    %38 = vector.extract_strided_slice %6 {offsets = [1, 0], sizes = [1, 8], strides = [1, 1]} : vector<2x8xi32> to vector<1x8xi32>
    %c0_i32_17 = arith.constant 0 : i32
    %39 = vector.broadcast %c0_i32_17 : i32 to vector<1x8xi32>
    %40 = arith.cmpi ne, %38, %39 : vector<1x8xi32>
    %cst_18 = arith.constant 9.99999971E-10 : f32
    %41 = vector.shape_cast %40 : vector<1x8xi1> to vector<1x8xi1>
    %42 = vector.broadcast %41 : vector<1x8xi1> to vector<8x8xi1>
    %43 = vector.broadcast %cst_18 : f32 to vector<8x8xf32>
    %44 = arith.select %42, %43, %37 : vector<8x8xi1>, vector<8x8xf32>
    %cst_19 = arith.constant dense<0xFF800000> : vector<8xf32>
    %45 = vector.multi_reduction <maximumf>, %44, %cst_19 [1] : vector<8x8xf32> to vector<8xf32>
    %46 = vector.shape_cast %45 : vector<8xf32> to vector<8x1xf32>
    %47 = vector.broadcast %46 : vector<8x1xf32> to vector<8x8xf32>
    %48 = arith.subf %44, %47 : vector<8x8xf32>
    %49 = math.exp %48 : vector<8x8xf32>
    %cst_20 = arith.constant dense<0.000000e+00> : vector<8xf32>
    %50 = vector.multi_reduction <add>, %49, %cst_20 [1] : vector<8x8xf32> to vector<8xf32>
    %51 = vector.shape_cast %50 : vector<8xf32> to vector<8x1xf32>
    %52 = tpu.reciprocal %51 {approx = true} : vector<8x1xf32> -> vector<8x1xf32>
    %53 = vector.broadcast %52 : vector<8x1xf32> to vector<8x8xf32>
    %54 = arith.mulf %49, %53 : vector<8x8xf32>
    %cst_21 = arith.constant dense<0.000000e+00> : vector<8x16xf32>
    %55 = tpu.matmul %54, %34, %cst_21 {dimension_numbers = #tpu.dot_dimension_numbers<[1], [0], [0], [1], [0, 0, 1, 1], [], []>} : vector<8x8xf32>, vector<8x16xf32>, vector<8x16xf32> -> vector<8x16xf32>
    %c8 = arith.constant 8 : index
    %c0_22 = arith.constant 0 : index
    %56 = vector.load %arg4[%c8, %c0_22] : memref<16x16xf32, #tpu.memory_space<vmem>>, vector<8x16xf32>
    tpu.vector_store %arg4[%c8, %c0_22], %55 {strides = array<i32>} : memref<16x16xf32, #tpu.memory_space<vmem>>, vector<8x16xf32>,
    return
  }
}

</mosaic_0001>

<llo_original>
// kernel: tpu_custom_call.1
$region0: #{tpu_custom_call.1}
  #allocation0 [shape = 'u32[]', space=smem, size = 0x4, offset = 0x4, fixed_abs, tag = 'smem constant byte address 0x4 - core index']
  #allocation1 [shape = 'u32[144,128]{1,0:T(1,128)}', space=vmem, size = 0x12000, scoped, tag = 'internal scratch']
  %s0 = inlined_call_operand.hbm [shape: f32[16,32], index: 0, kind: input, shape index: {}]
  %s1 = inlined_call_operand.vmem [shape: s32[2,8], index: 1, kind: input, shape index: {}]
  %s2 = inlined_call_operand.hbm [shape: f32[32,48], index: 2, kind: input, shape index: {}]
  %s3 = inlined_call_operand.vmem [shape: f32[1,48], index: 3, kind: input, shape index: {}]
  %s4 = inlined_call_operand.hbm [shape: f32[16,16], index: 4, kind: output, shape index: {}]
  %s5 = sld [smem:[#allocation0]]
  $region34: #{tpu_custom_call.1} parent=0
    _
  %s7 = ssub.s32 1, %s5
  %s8 = scalar_select 0, %s7, %s5
  $region1: #{tpu_custom_call.1} parent=0
    #allocation2 [shape = 'u8[8192]{0}', space=vmem, size = 0x2000, scoped, tag = 'input window, operand 0, single buffered']
    #allocation3 [shape = 's32[1]{0}', space=sflag, size = 0x4, scoped, tag = 'scoped memory for tpu_custom_call.1']
    #allocation4 [shape = 's32[1]{0}', space=sflag, size = 0x4, scoped, tag = 'scoped memory for tpu_custom_call.1']
    #allocation5 [shape = 'u8[16384]{0}', space=vmem, size = 0x4000, scoped, tag = 'input window, operand 2, single buffered']
    #allocation6 [shape = 's32[1]{0}', space=sflag, size = 0x4, scoped, tag = 'scoped memory for tpu_custom_call.1']
    #allocation7 [shape = 'u8[8192]{0}', space=vmem, size = 0x2000, scoped, tag = 'output window, operand 0, single buffered']
    %9 = vsyncpa [#allocation3], 0
    %10 = vsyncpa [#allocation6], 0
    %11 = vsyncpa [#allocation4], 0
    // Predicated region
    $region2: #{tpu_custom_call.1} parent=1 // pred_check
      _
    $region3: #{tpu_custom_call.1} parent=1 // pred_check_branch
      %13 = sbr.rel (0) target = $region5
    $region4: #{tpu_custom_call.1} parent=1 // pred_region
      %s15 = ssub.s32 256, 256
      %16 = vsyncadd [#allocation3], %s15
      %s17 = sshll.u32 [#allocation2], 4
      %s18 = int_to_ptr.vmem [resolvable:$true] %s17
      %23 = dma.hbm_to_vmem [thread:$0]  %s0, 256, %s18, [#allocation3], 128, 128, 8
    $region5: #{tpu_custom_call.1} parent=1 // pred_fallthru
      _
    // Predicated region
    $region6: #{tpu_custom_call.1} parent=1 // pred_check
      _
    $region7: #{tpu_custom_call.1} parent=1 // pred_check_branch
      %25 = sbr.rel (0) target = $region9
    $region8: #{tpu_custom_call.1} parent=1 // pred_region
      _
    $region9: #{tpu_custom_call.1} parent=1 // pred_fallthru
      _
    // Predicated region
    $region10: #{tpu_custom_call.1} parent=1 // pred_check
      _
    $region11: #{tpu_custom_call.1} parent=1 // pred_check_branch
      %27 = sbr.rel (0) target = $region13
    $region12: #{tpu_custom_call.1} parent=1 // pred_region
      %s29 = ssub.s32 512, 512
      %30 = vsyncadd [#allocation6], %s29
      %s31 = sshll.u32 [#allocation5], 4
      %s32 = int_to_ptr.vmem [resolvable:$true] %s31
      %37 = dma.hbm_to_vmem [thread:$0]  %s2, 512, %s32, [#allocation6], 128, 128, 8
    $region13: #{tpu_custom_call.1} parent=1 // pred_fallthru
      _
    // Predicated region
    $region14: #{tpu_custom_call.1} parent=1 // pred_check
      _
    $region15: #{tpu_custom_call.1} parent=1 // pred_check_branch
      %39 = sbr.rel (0) target = $region17
    $region16: #{tpu_custom_call.1} parent=1 // pred_region
      _
    $region17: #{tpu_custom_call.1} parent=1 // pred_fallthru
      _
    // Predicated region
    $region18: #{tpu_custom_call.1} parent=1 // pred_check
      _
    $region19: #{tpu_custom_call.1} parent=1 // pred_check_branch
      %41 = sbr.rel (0) target = $region21
    $region20: #{tpu_custom_call.1} parent=1 // pred_region
      %42 = dma.done [#allocation3], 256
    $region21: #{tpu_custom_call.1} parent=1 // pred_fallthru
      _
    // Predicated region
    $region22: #{tpu_custom_call.1} parent=1 // pred_check
      _
    $region23: #{tpu_custom_call.1} parent=1 // pred_check_branch
      %44 = sbr.rel (0) target = $region25
    $region24: #{tpu_custom_call.1} parent=1 // pred_region
      %45 = dma.done [#allocation6], 512
    $region25: #{tpu_custom_call.1} parent=1 // pred_fallthru
      _
    %v46 = vld [vmem:[#allocation2] sm:$0xff]
    %v47 = vld [vmem:[#allocation2 + $0x8] sm:$0xff]
    %v48 = vld [vmem:[#allocation5] sm:$0xff]
    %v49 = vld [vmem:[#allocation5 + $0x8] sm:$0xff]
    %v50 = vld [vmem:[#allocation5 + $0x10] sm:$0xff]
    %v51 = vld [vmem:[#allocation5 + $0x18] sm:$0xff]
    %v52 = vld [vmem:[%s3] sm:$0x1]
    %v54 = vlaneseq
    %v55 = vshrl.u32 %v54, 7
    %v56 = vsub.s32 0, %v55
    %v57 = vrot.slane %v52, %v56
    %vm59 = vcmask 261120
    %v61 = vsel %vm59, %v46, 0
    %v64 = vsel %vm59, %v47, 0
    %66 = vmatprep.subr.mxu0 0.0
    %67 = vmatpush1.msra.mxu0 %v48
    %68 = vmatprep.subr.mxu0 0.0
    %69 = vmatpush1.msra.mxu0 %v49
    %70 = vmatprep.subr.mxu0 0.0
    %71 = vmatpush1.msra.mxu0 %v50
    %72 = vmatprep.subr.mxu0 0.0
    %73 = vmatpush1.msra.mxu0 %v51
    %74 = vmatprep.subr.mxu0 0.0
    %75 = vmatpush1.msra.mxu0 0.0
    %76 = vmatprep.subr.mxu0 0.0
    %77 = vmatpush1.msra.mxu0 0.0
    %78 = vmatprep.subr.mxu0 0.0
    %79 = vmatpush1.msra.mxu0 0.0
    %80 = vmatprep.subr.mxu0 0.0
    %81 = vmatpush1.msra.mxu0 0.0
    %82 = vmatprep.subr.mxu0 0.0
    %83 = vmatpush1.msra.mxu0 0.0
    %84 = vmatprep.subr.mxu0 0.0
    %85 = vmatpush1.msra.mxu0 0.0
    %86 = vmatprep.subr.mxu0 0.0
    %87 = vmatpush1.msra.mxu0 0.0
    %88 = vmatprep.subr.mxu0 0.0
    %89 = vmatpush1.msra.mxu0 0.0
    %90 = vmatprep.subr.mxu0 0.0
    %91 = vmatpush1.msra.mxu0 0.0
    %92 = vmatprep.subr.mxu0 0.0
    %93 = vmatpush1.msra.mxu0 0.0
    %94 = vmatprep.subr.mxu0 0.0
    %95 = vmatpush1.msra.mxu0 0.0
    %96 = vmatprep.subr.mxu0 0.0
    %97 = vmatpush1.msra.mxu0 0.0
    %98 = vmatprep.subr.mxu0 0.0
    %99 = vmatpush1.msra.mxu0 0.0
    %100 = vmatprep.subr.mxu0 0.0
    %101 = vmatpush1.msra.mxu0 0.0
    %102 = vmatprep.subr.mxu0 0.0
    %103 = vmatpush1.msra.mxu0 0.0
    %104 = vmatprep.subr.mxu0 0.0
    %105 = vmatpush1.msra.mxu0 0.0
    %106 = vmatprep.subr.mxu0 0.0
    %107 = vmatpush1.msra.mxu0 0.0
    %108 = vmatprep.subr.mxu0 0.0
    %109 = vmatpush1.msra.mxu0 0.0
    %110 = vmatprep.subr.mxu0 0.0
    %111 = vmatpush1.msra.mxu0 0.0
    %112 = vmatprep.subr.mxu0 0.0
    %113 = vmatpush1.msra.mxu0 0.0
    %114 = vmatprep.subr.mxu0 0.0
    %115 = vmatpush1.msra.mxu0 0.0
    %116 = vmatprep.subr.mxu0 0.0
    %117 = vmatpush1.msra.mxu0 0.0
    %118 = vmatprep.subr.mxu0 0.0
    %119 = vmatpush1.msra.mxu0 0.0
    %120 = vmatprep.subr.mxu0 0.0
    %121 = vmatpush1.msra.mxu0 0.0
    %122 = vmatprep.subr.mxu0 0.0
    %123 = vmatpush1.msra.mxu0 0.0
    %124 = vmatprep.subr.mxu0 0.0
    %125 = vmatpush1.msra.mxu0 0.0
    %126 = vmatprep.subr.mxu0 0.0
    %127 = vmatpush1.msra.mxu0 0.0
    %128 = vmatprep.subr.mxu0 0.0
    %129 = vmatpush1.msra.mxu0 0.0
    %130 = vmatprep.mubr.f32.mxu0 0.0
    %131 = vmatmul.mubr.f32.gmra.mrb[0].mxu0 %v61
    %v132 = vpop.f32.mrb[0].mxu0
    %v133 = vadd.f32 %v57, %v132
    %v134 = vpop.f32.mrb[0].mxu0
    %135 = vmatprep.mubr.f32.mxu0 0.0
    %136 = vmatmul.mubr.f32.gmra.mrb[0].mxu0 %v64
    %v137 = vpop.f32.mrb[0].mxu0
    %v138 = vadd.f32 %v57, %v137
    %v139 = vpop.f32.mrb[0].mxu0
    %140 = vdwg.mxu0
    %v141 = vld [vmem:[%s1] sm:$0x3]
    %143 = vrot.lane.b32.xlu0 %v133, 112
    %v144 = vpop.permute.xlu0 %143
    %vm145 = vcmask 130048
    %v146 = vsel %vm145, %v133, 0
    %v148 = vsel %vm145, %v144, 0
    %150 = vmatprep.subr.mxu0 0.0
    %151 = vmatpush1.xpose.msra.mxu0 %v148
    %152 = vmatprep.subr.mxu0 0.0
    %153 = vmatpush1.xpose.msra.mxu0 0.0
    %154 = vmatprep.subr.mxu0 0.0
    %155 = vmatpush1.xpose.msra.mxu0 0.0
    %156 = vmatprep.subr.mxu0 0.0
    %157 = vmatpush1.xpose.msra.mxu0 0.0
    %158 = vmatprep.subr.mxu0 0.0
    %159 = vmatpush1.xpose.msra.mxu0 0.0
    %160 = vmatprep.subr.mxu0 0.0
    %161 = vmatpush1.xpose.msra.mxu0 0.0
    %162 = vmatprep.subr.mxu0 0.0
    %163 = vmatpush1.xpose.msra.mxu0 0.0
    %164 = vmatprep.subr.mxu0 0.0
    %165 = vmatpush1.xpose.msra.mxu0 0.0
    %166 = vmatprep.subr.mxu0 0.0
    %167 = vmatpush1.xpose.msra.mxu0 0.0
    %168 = vmatprep.subr.mxu0 0.0
    %169 = vmatpush1.xpose.msra.mxu0 0.0
    %170 = vmatprep.subr.mxu0 0.0
    %171 = vmatpush1.xpose.msra.mxu0 0.0
    %172 = vmatprep.subr.mxu0 0.0
    %173 = vmatpush1.xpose.msra.mxu0 0.0
    %174 = vmatprep.subr.mxu0 0.0
    %175 = vmatpush1.xpose.msra.mxu0 0.0
    %176 = vmatprep.subr.mxu0 0.0
    %177 = vmatpush1.xpose.msra.mxu0 0.0
    %178 = vmatprep.subr.mxu0 0.0
    %179 = vmatpush1.xpose.msra.mxu0 0.0
    %180 = vmatprep.subr.mxu0 0.0
    %181 = vmatpush1.xpose.msra.mxu0 0.0
    %182 = vmatprep.subr.mxu0 0.0
    %183 = vmatpush1.xpose.msra.mxu0 0.0
    %184 = vmatprep.subr.mxu0 0.0
    %185 = vmatpush1.xpose.msra.mxu0 0.0
    %186 = vmatprep.subr.mxu0 0.0
    %187 = vmatpush1.xpose.msra.mxu0 0.0
    %188 = vmatprep.subr.mxu0 0.0
    %189 = vmatpush1.xpose.msra.mxu0 0.0
    %190 = vmatprep.subr.mxu0 0.0
    %191 = vmatpush1.xpose.msra.mxu0 0.0
    %192 = vmatprep.subr.mxu0 0.0
    %193 = vmatpush1.xpose.msra.mxu0 0.0
    %194 = vmatprep.subr.mxu0 0.0
    %195 = vmatpush1.xpose.msra.mxu0 0.0
    %196 = vmatprep.subr.mxu0 0.0
    %197 = vmatpush1.xpose.msra.mxu0 0.0
    %198 = vmatprep.subr.mxu0 0.0
    %199 = vmatpush1.xpose.msra.mxu0 0.0
    %200 = vmatprep.subr.mxu0 0.0
    %201 = vmatpush1.xpose.msra.mxu0 0.0
    %202 = vmatprep.subr.mxu0 0.0
    %203 = vmatpush1.xpose.msra.mxu0 0.0
    %204 = vmatprep.subr.mxu0 0.0
    %205 = vmatpush1.xpose.msra.mxu0 0.0
    %206 = vmatprep.subr.mxu0 0.0
    %207 = vmatpush1.xpose.msra.mxu0 0.0
    %208 = vmatprep.subr.mxu0 0.0
    %209 = vmatpush1.xpose.msra.mxu0 0.0
    %210 = vmatprep.subr.mxu0 0.0
    %211 = vmatpush1.xpose.msra.mxu0 0.0
    %212 = vmatprep.subr.mxu0 0.0
    %213 = vmatpush1.xpose.msra.mxu0 0.0
    %214 = vmatprep.mubr.f32.mxu0 0.0
    %215 = vmatmul.mubr.f32.gmra.mrb[0].mxu0 %v146
    %v216 = vpop.f32.mrb[0].mxu0
    %v217 = vadd.f32 0.0, %v216
    %v218 = vpop.f32.mrb[0].mxu0
    %219 = vdwg.mxu0
    %v220 = vmul.f32 %v217, 0.25
    %vm221 = vcmp.ne.s32.totalorder %v141, 0
    %v222 = vsel %vm221, 1, 0
    %v223 = vlaneseq
    %v224 = vshrl.u32 %v223, 7
    %v225 = vsub.s32 0, %v224
    %v226 = vrot.slane %v222, %v225
    %vm227 = vcmp.eq.s32.totalorder %v226, 1
    %v228 = vsel %vm227, 1e-09, %v220
    %vm229 = vcmask 64512
    %v230 = vsel %vm229, %v228, -inf
    %231 = vmax.xlane.f32.xlu0 %v230
    %v232 = vpop.xlane.xlu0 %231
    %v233 = vsub.f32 %v228, %v232
    %v234 = vmul.f32 %v233, 1.442695
    %v235 = vpow.pop %v234
    %v236 = vsel %vm229, %v235, 0.0
    %237 = vadd.xlane.f32.xlu0 %v236
    %v238 = vpop.xlane.xlu0 %237
    %v239 = vrcp.pop %v238
    %v240 = vmul.f32 %v235, %v239
    %241 = vrot.lane.b32.xlu0 %v133, 96
    %v242 = vpop.permute.xlu0 %241
    %v245 = vsel %vm229, %v240, 0
    %247 = vmatprep.subr.mxu0 0.0
    %248 = vmatpush1.msra.mxu0 %v242
    %249 = vmatprep.subr.mxu0 0.0
    %250 = vmatpush1.msra.mxu0 0.0
    %251 = vmatprep.subr.mxu0 0.0
    %252 = vmatpush1.msra.mxu0 0.0
    %253 = vmatprep.subr.mxu0 0.0
    %254 = vmatpush1.msra.mxu0 0.0
    %255 = vmatprep.subr.mxu0 0.0
    %256 = vmatpush1.msra.mxu0 0.0
    %257 = vmatprep.subr.mxu0 0.0
    %258 = vmatpush1.msra.mxu0 0.0
    %259 = vmatprep.subr.mxu0 0.0
    %260 = vmatpush1.msra.mxu0 0.0
    %261 = vmatprep.subr.mxu0 0.0
    %262 = vmatpush1.msra.mxu0 0.0
    %263 = vmatprep.subr.mxu0 0.0
    %264 = vmatpush1.msra.mxu0 0.0
    %265 = vmatprep.subr.mxu0 0.0
    %266 = vmatpush1.msra.mxu0 0.0
    %267 = vmatprep.subr.mxu0 0.0
    %268 = vmatpush1.msra.mxu0 0.0
    %269 = vmatprep.subr.mxu0 0.0
    %270 = vmatpush1.msra.mxu0 0.0
    %271 = vmatprep.subr.mxu0 0.0
    %272 = vmatpush1.msra.mxu0 0.0
    %273 = vmatprep.subr.mxu0 0.0
    %274 = vmatpush1.msra.mxu0 0.0
    %275 = vmatprep.subr.mxu0 0.0
    %276 = vmatpush1.msra.mxu0 0.0
    %277 = vmatprep.subr.mxu0 0.0
    %278 = vmatpush1.msra.mxu0 0.0
    %279 = vmatprep.subr.mxu0 0.0
    %280 = vmatpush1.msra.mxu0 0.0
    %281 = vmatprep.subr.mxu0 0.0
    %282 = vmatpush1.msra.mxu0 0.0
    %283 = vmatprep.subr.mxu0 0.0
    %284 = vmatpush1.msra.mxu0 0.0
    %285 = vmatprep.subr.mxu0 0.0
    %286 = vmatpush1.msra.mxu0 0.0
    %287 = vmatprep.subr.mxu0 0.0
    %288 = vmatpush1.msra.mxu0 0.0
    %289 = vmatprep.subr.mxu0 0.0
    %290 = vmatpush1.msra.mxu0 0.0
    %291 = vmatprep.subr.mxu0 0.0
    %292 = vmatpush1.msra.mxu0 0.0
    %293 = vmatprep.subr.mxu0 0.0
    %294 = vmatpush1.msra.mxu0 0.0
    %295 = vmatprep.subr.mxu0 0.0
    %296 = vmatpush1.msra.mxu0 0.0
    %297 = vmatprep.subr.mxu0 0.0
    %298 = vmatpush1.msra.mxu0 0.0
    %299 = vmatprep.subr.mxu0 0.0
    %300 = vmatpush1.msra.mxu0 0.0
    %301 = vmatprep.subr.mxu0 0.0
    %302 = vmatpush1.msra.mxu0 0.0
    %303 = vmatprep.subr.mxu0 0.0
    %304 = vmatpush1.msra.mxu0 0.0
    %305 = vmatprep.subr.mxu0 0.0
    %306 = vmatpush1.msra.mxu0 0.0
    %307 = vmatprep.subr.mxu0 0.0
    %308 = vmatpush1.msra.mxu0 0.0
    %309 = vmatprep.subr.mxu0 0.0
    %310 = vmatpush1.msra.mxu0 0.0
    %311 = vmatprep.mubr.f32.mxu0 0.0
    %312 = vmatmul.mubr.f32.gmra.mrb[0].mxu0 %v245
    %v313 = vpop.f32.mrb[0].mxu0
    %v314 = vadd.f32 0.0, %v313
    %v315 = vpop.f32.mrb[0].mxu0
    %316 = vdwg.mxu0
    %317 = vst.msk [vmem:[#allocation7] sm:$0xff] %vm145, %v314
    %319 = vrot.lane.b32.xlu0 %v138, 112
    %v320 = vpop.permute.xlu0 %319
    %v321 = vsel %vm145, %v138, 0
    %v323 = vsel %vm145, %v320, 0
    %325 = vmatprep.subr.mxu0 0.0
    %326 = vmatpush1.xpose.msra.mxu0 %v323
    %327 = vmatprep.subr.mxu0 0.0
    %328 = vmatpush1.xpose.msra.mxu0 0.0
    %329 = vmatprep.subr.mxu0 0.0
    %330 = vmatpush1.xpose.msra.mxu0 0.0
    %331 = vmatprep.subr.mxu0 0.0
    %332 = vmatpush1.xpose.msra.mxu0 0.0
    %333 = vmatprep.subr.mxu0 0.0
    %334 = vmatpush1.xpose.msra.mxu0 0.0
    %335 = vmatprep.subr.mxu0 0.0
    %336 = vmatpush1.xpose.msra.mxu0 0.0
    %337 = vmatprep.subr.mxu0 0.0
    %338 = vmatpush1.xpose.msra.mxu0 0.0
    %339 = vmatprep.subr.mxu0 0.0
    %340 = vmatpush1.xpose.msra.mxu0 0.0
    %341 = vmatprep.subr.mxu0 0.0
    %342 = vmatpush1.xpose.msra.mxu0 0.0
    %343 = vmatprep.subr.mxu0 0.0
    %344 = vmatpush1.xpose.msra.mxu0 0.0
    %345 = vmatprep.subr.mxu0 0.0
    %346 = vmatpush1.xpose.msra.mxu0 0.0
    %347 = vmatprep.subr.mxu0 0.0
    %348 = vmatpush1.xpose.msra.mxu0 0.0
    %349 = vmatprep.subr.mxu0 0.0
    %350 = vmatpush1.xpose.msra.mxu0 0.0
    %351 = vmatprep.subr.mxu0 0.0
    %352 = vmatpush1.xpose.msra.mxu0 0.0
    %353 = vmatprep.subr.mxu0 0.0
    %354 = vmatpush1.xpose.msra.mxu0 0.0
    %355 = vmatprep.subr.mxu0 0.0
    %356 = vmatpush1.xpose.msra.mxu0 0.0
    %357 = vmatprep.subr.mxu0 0.0
    %358 = vmatpush1.xpose.msra.mxu0 0.0
    %359 = vmatprep.subr.mxu0 0.0
    %360 = vmatpush1.xpose.msra.mxu0 0.0
    %361 = vmatprep.subr.mxu0 0.0
    %362 = vmatpush1.xpose.msra.mxu0 0.0
    %363 = vmatprep.subr.mxu0 0.0
    %364 = vmatpush1.xpose.msra.mxu0 0.0
    %365 = vmatprep.subr.mxu0 0.0
    %366 = vmatpush1.xpose.msra.mxu0 0.0
    %367 = vmatprep.subr.mxu0 0.0
    %368 = vmatpush1.xpose.msra.mxu0 0.0
    %369 = vmatprep.subr.mxu0 0.0
    %370 = vmatpush1.xpose.msra.mxu0 0.0
    %371 = vmatprep.subr.mxu0 0.0
    %372 = vmatpush1.xpose.msra.mxu0 0.0
    %373 = vmatprep.subr.mxu0 0.0
    %374 = vmatpush1.xpose.msra.mxu0 0.0
    %375 = vmatprep.subr.mxu0 0.0
    %376 = vmatpush1.xpose.msra.mxu0 0.0
    %377 = vmatprep.subr.mxu0 0.0
    %378 = vmatpush1.xpose.msra.mxu0 0.0
    %379 = vmatprep.subr.mxu0 0.0
    %380 = vmatpush1.xpose.msra.mxu0 0.0
    %381 = vmatprep.subr.mxu0 0.0
    %382 = vmatpush1.xpose.msra.mxu0 0.0
    %383 = vmatprep.subr.mxu0 0.0
    %384 = vmatpush1.xpose.msra.mxu0 0.0
    %385 = vmatprep.subr.mxu0 0.0
    %386 = vmatpush1.xpose.msra.mxu0 0.0
    %387 = vmatprep.subr.mxu0 0.0
    %388 = vmatpush1.xpose.msra.mxu0 0.0
    %389 = vmatprep.mubr.f32.mxu0 0.0
    %390 = vmatmul.mubr.f32.gmra.mrb[0].mxu0 %v321
    %v391 = vpop.f32.mrb[0].mxu0
    %v392 = vadd.f32 0.0, %v391
    %v393 = vpop.f32.mrb[0].mxu0
    %394 = vdwg.mxu0
    %v395 = vmul.f32 %v392, 0.25
    %v396 = vlaneseq
    %v397 = vshrl.u32 %v396, 7
    %v398 = vsub.s32 1, %v397
    %v399 = vrot.slane %v222, %v398
    %vm400 = vcmp.eq.s32.totalorder %v399, 1
    %v401 = vsel %vm400, 1e-09, %v395
    %v402 = vsel %vm229, %v401, -inf
    %403 = vmax.xlane.f32.xlu0 %v402
    %v404 = vpop.xlane.xlu0 %403
    %v405 = vsub.f32 %v401, %v404
    %v406 = vmul.f32 %v405, 1.442695
    %v407 = vpow.pop %v406
    %v408 = vsel %vm229, %v407, 0.0
    %409 = vadd.xlane.f32.xlu0 %v408
    %v410 = vpop.xlane.xlu0 %409
    %v411 = vrcp.pop %v410
    %v412 = vmul.f32 %v407, %v411
    %413 = vrot.lane.b32.xlu0 %v138, 96
    %v414 = vpop.permute.xlu0 %413
    %v417 = vsel %vm229, %v412, 0
    %419 = vmatprep.subr.mxu0 0.0
    %420 = vmatpush1.msra.mxu0 %v414
    %421 = vmatprep.subr.mxu0 0.0
    %422 = vmatpush1.msra.mxu0 0.0
    %423 = vmatprep.subr.mxu0 0.0
    %424 = vmatpush1.msra.mxu0 0.0
    %425 = vmatprep.subr.mxu0 0.0
    %426 = vmatpush1.msra.mxu0 0.0
    %427 = vmatprep.subr.mxu0 0.0
    %428 = vmatpush1.msra.mxu0 0.0
    %429 = vmatprep.subr.mxu0 0.0
    %430 = vmatpush1.msra.mxu0 0.0
    %431 = vmatprep.subr.mxu0 0.0
    %432 = vmatpush1.msra.mxu0 0.0
    %433 = vmatprep.subr.mxu0 0.0
    %434 = vmatpush1.msra.mxu0 0.0
    %435 = vmatprep.subr.mxu0 0.0
    %436 = vmatpush1.msra.mxu0 0.0
    %437 = vmatprep.subr.mxu0 0.0
    %438 = vmatpush1.msra.mxu0 0.0
    %439 = vmatprep.subr.mxu0 0.0
    %440 = vmatpush1.msra.mxu0 0.0
    %441 = vmatprep.subr.mxu0 0.0
    %442 = vmatpush1.msra.mxu0 0.0
    %443 = vmatprep.subr.mxu0 0.0
    %444 = vmatpush1.msra.mxu0 0.0
    %445 = vmatprep.subr.mxu0 0.0
    %446 = vmatpush1.msra.mxu0 0.0
    %447 = vmatprep.subr.mxu0 0.0
    %448 = vmatpush1.msra.mxu0 0.0
    %449 = vmatprep.subr.mxu0 0.0
    %450 = vmatpush1.msra.mxu0 0.0
    %451 = vmatprep.subr.mxu0 0.0
    %452 = vmatpush1.msra.mxu0 0.0
    %453 = vmatprep.subr.mxu0 0.0
    %454 = vmatpush1.msra.mxu0 0.0
    %455 = vmatprep.subr.mxu0 0.0
    %456 = vmatpush1.msra.mxu0 0.0
    %457 = vmatprep.subr.mxu0 0.0
    %458 = vmatpush1.msra.mxu0 0.0
    %459 = vmatprep.subr.mxu0 0.0
    %460 = vmatpush1.msra.mxu0 0.0
    %461 = vmatprep.subr.mxu0 0.0
    %462 = vmatpush1.msra.mxu0 0.0
    %463 = vmatprep.subr.mxu0 0.0
    %464 = vmatpush1.msra.mxu0 0.0
    %465 = vmatprep.subr.mxu0 0.0
    %466 = vmatpush1.msra.mxu0 0.0
    %467 = vmatprep.subr.mxu0 0.0
    %468 = vmatpush1.msra.mxu0 0.0
    %469 = vmatprep.subr.mxu0 0.0
    %470 = vmatpush1.msra.mxu0 0.0
    %471 = vmatprep.subr.mxu0 0.0
    %472 = vmatpush1.msra.mxu0 0.0
    %473 = vmatprep.subr.mxu0 0.0
    %474 = vmatpush1.msra.mxu0 0.0
    %475 = vmatprep.subr.mxu0 0.0
    %476 = vmatpush1.msra.mxu0 0.0
    %477 = vmatprep.subr.mxu0 0.0
    %478 = vmatpush1.msra.mxu0 0.0
    %479 = vmatprep.subr.mxu0 0.0
    %480 = vmatpush1.msra.mxu0 0.0
    %481 = vmatprep.subr.mxu0 0.0
    %482 = vmatpush1.msra.mxu0 0.0
    %483 = vmatprep.mubr.f32.mxu0 0.0
    %484 = vmatmul.mubr.f32.gmra.mrb[0].mxu0 %v417
    %v485 = vpop.f32.mrb[0].mxu0
    %v486 = vadd.f32 0.0, %v485
    %v487 = vpop.f32.mrb[0].mxu0
    %488 = vdwg.mxu0
    %489 = vst.msk [vmem:[#allocation7 + $0x8] sm:$0xff] %vm145, %v486
    // Predicated region
    $region26: #{tpu_custom_call.1} parent=1 // pred_check
      _
    $region27: #{tpu_custom_call.1} parent=1 // pred_check_branch
      %491 = sbr.rel (0) target = $region29
    $region28: #{tpu_custom_call.1} parent=1 // pred_region
      %s493 = ssub.s32 256, 256
      %494 = vsyncadd [#allocation4], %s493
      %s495 = sshll.u32 [#allocation7], 4
      %s496 = int_to_ptr.vmem [resolvable:$true] %s495
      %501 = dma.vmem_to_hbm [thread:$0]  %s496, 256, %s4, [#allocation4], 128, 128, 8
    $region29: #{tpu_custom_call.1} parent=1 // pred_fallthru
      _
    // Predicated region
    $region30: #{tpu_custom_call.1} parent=1 // pred_check
      _
    $region31: #{tpu_custom_call.1} parent=1 // pred_check_branch
      %503 = sbr.rel (0) target = $region33
    $region32: #{tpu_custom_call.1} parent=1 // pred_region
      %504 = dma.done [#allocation4], 256
    $region33: #{tpu_custom_call.1} parent=1 // pred_fallthru
      _
    %505 = vsyncpa [#allocation3], 1
    %506 = vsyncpa [#allocation6], 1
    %507 = vsyncpa [#allocation4], 1

</llo_original>
